<compile_context>
chip_gen: v6e
topology: v6e:2x2x1
jax: 0.10.0
libtpu: 0.0.40
codegen_flags: <defaults>
</compile_context>

<pallas_src>
import jax
import jax.numpy as jnp
from jax.experimental import pallas as pl
from jax.experimental.pallas import tpu as pltpu


def _identity_copy_kernel(w_ref, o_ref):
    # Identity forward: stream the tile through VMEM.
    o_ref[...] = w_ref[...]


_LANE_WIDTHS = (4096, 2048, 1024, 512, 256, 128)
_TARGET_TILE_BYTES = 8 * 1024 * 1024  # ~8 MiB per tile


def _as_lane_dense_2d(shape):
    """Pick a 2-D (rows, lanes) view of the flattened tensor.

    Prefers a lane-dense last dim (big multiple of 128) so stores are
    unmasked full-lane vst; falls back to (leading, last_dim) otherwise.
    """
    total = 1
    for d in shape:
        total *= d
    for lanes in _LANE_WIDTHS:
        if total % lanes == 0:
            return total // lanes, lanes
    if len(shape) >= 2:
        return total // shape[-1], shape[-1]
    return 1, total


def batched_identity(w: jax.Array) -> jax.Array:
    """Pallas implementation of BatchedIdentity.forward (and right_inverse)."""
    orig_shape = w.shape
    if w.size == 0:
        return w  # nothing to copy

    R, C = _as_lane_dense_2d(orig_shape)
    w2 = w.reshape(R, C)

    itemsize = jnp.dtype(w.dtype).itemsize
    # Sublanes per vreg for this dtype: 8 (f32) / 16 (bf16) / 32 (int8/fp8).
    pack = max(8, 32 // max(1, itemsize))

    row_bytes = C * itemsize
    rows_target = max(1, _TARGET_TILE_BYTES // max(1, row_bytes))
    if rows_target >= R:
        # Whole tensor fits in one tile; split in two (if possible) so v7x's
        # two TensorCores both get work on the parallel axis.
        if R >= 2 * pack:
            tm = ((R // 2) // pack) * pack
        else:
            tm = R  # full-extent block (always a legal block dim)
    else:
        tm = max(pack, (rows_target // pack) * pack)

    tile_bytes = tm * row_bytes
    # input + output, each double-buffered, plus slack; cap below v7x's 64 MiB.
    vmem_limit = int(min(48 * 2**20, max(32 * 2**20, 4 * tile_bytes + 2 * 2**20)))

    grid = (pl.cdiv(R, tm),)

    out = pl.pallas_call(
        _identity_copy_kernel,
        out_shape=jax.ShapeDtypeStruct((R, C), w.dtype),
        grid=grid,
        in_specs=[pl.BlockSpec((tm, C), lambda i: (i, 0))],
        out_specs=pl.BlockSpec((tm, C), lambda i: (i, 0)),
        input_output_aliases={0: 0},
        compiler_params=pltpu.CompilerParams(
            dimension_semantics=("parallel",),
            vmem_limit_bytes=vmem_limit,
        ),
    )(w2)

    return out.reshape(orig_shape)


if __name__ == "__main__":
    key = jax.random.PRNGKey(0)

    # A small batched weight stack consistent with a reparametrized layer:
    # (batch=2, M=16, N=32). Total = 1024 -> lane-dense (1, 1024) slab path.
    w = jax.random.normal(key, (2, 16, 32), dtype=jnp.float32)
    y = jax.block_until_ready(batched_identity(w))
    assert y.shape == w.shape and y.dtype == w.dtype
    assert bool(jnp.array_equal(y, w))

    # Exercise the ragged fallback path (total not divisible by 128).
    w_odd = jax.random.normal(jax.random.PRNGKey(1), (3, 5, 7), dtype=jnp.float32)
    y_odd = jax.block_until_ready(batched_identity(w_odd))
    assert y_odd.shape == w_odd.shape and bool(jnp.array_equal(y_odd, w_odd))

    print("KERNEL_OK")
</pallas_src>

<mosaic_0001>
module attributes {stable_mosaic.version = 11 : i64} {
  func.func @_identity_copy_kernel(%arg0: i32, %arg1: memref<1x1024xf32, #tpu.memory_space<vmem>>, %arg2: memref<1x1024xf32, #tpu.memory_space<vmem>>) attributes {dimension_semantics = [#tpu.dimension_semantics<parallel>], iteration_bounds = array<i64: 1>, scalar_prefetch = 0 : i64, scratch_operands = 0 : i64, tpu.core_type = #tpu.core_type<tc>, window_params = [{transform_indices = @transform_0, window_bounds = array<i64: 1, 1024>}, {transform_indices = @transform_1, window_bounds = array<i64: 1, 1024>}]} {
    %c0 = arith.constant 0 : index
    %c0_0 = arith.constant 0 : index
    %0 = vector.load %arg1[%c0, %c0_0] : memref<1x1024xf32, #tpu.memory_space<vmem>>, vector<1x1024xf32>
    %c0_1 = arith.constant 0 : index
    %c0_2 = arith.constant 0 : index
    %1 = vector.load %arg2[%c0_1, %c0_2] : memref<1x1024xf32, #tpu.memory_space<vmem>>, vector<1x1024xf32>
    tpu.vector_store %arg2[%c0_1, %c0_2], %0 {strides = array<i32>} : memref<1x1024xf32, #tpu.memory_space<vmem>>, vector<1x1024xf32>,
    return
  }
  func.func @transform_0(%arg0: i32) -> (i32, i32) {
    %c0_i32 = arith.constant 0 : i32
    %c0_i32_0 = arith.constant 0 : i32
    return %arg0, %c0_i32 : i32, i32
  }
  func.func @transform_1(%arg0: i32) -> (i32, i32) {
    %c0_i32 = arith.constant 0 : i32
    %c0_i32_0 = arith.constant 0 : i32
    return %arg0, %c0_i32 : i32, i32
  }
}

</mosaic_0001>

<llo_original>
// kernel: tpu_custom_call.1
$region0: #{tpu_custom_call.1}
  #allocation0 [shape = 'u32[]', space=smem, size = 0x4, offset = 0x4, fixed_abs, tag = 'smem constant byte address 0x4 - core index']
  #allocation1 [shape = 'u32[144,128]{1,0:T(1,128)}', space=vmem, size = 0x12000, scoped, tag = 'internal scratch']
  %s0 = inlined_call_operand.hbm [shape: f32[1,1024], index: 0, kind: input, shape index: {}, may-alias: {0,1}]
  %s1 = inlined_call_operand.hbm [shape: f32[1,1024], index: 1, kind: output, shape index: {}, may-alias: {0,1}]
  %s2 = sld [smem:[#allocation0]]
  $region18: #{tpu_custom_call.1} parent=0
    _
  %s4 = ssub.s32 1, %s2
  %s5 = scalar_select 0, %s4, %s2
  $region1: #{tpu_custom_call.1} parent=0
    #allocation2 [shape = 'u8[4096]{0}', space=vmem, size = 0x1000, scoped, tag = 'input window, operand 0, single buffered']
    #allocation3 [shape = 's32[1]{0}', space=sflag, size = 0x4, scoped, tag = 'scoped memory for tpu_custom_call.1']
    #allocation4 [shape = 's32[1]{0}', space=sflag, size = 0x4, scoped, tag = 'scoped memory for tpu_custom_call.1']
    #allocation5 [shape = 'u8[4096]{0}', space=vmem, size = 0x1000, scoped, tag = 'output window, operand 0, single buffered']
    %6 = vsyncpa [#allocation3], 0
    %7 = vsyncpa [#allocation4], 0
    // Predicated region
    $region2: #{tpu_custom_call.1} parent=1 // pred_check
      _
    $region3: #{tpu_custom_call.1} parent=1 // pred_check_branch
      %9 = sbr.rel (0) target = $region5
    $region4: #{tpu_custom_call.1} parent=1 // pred_region
      %s11 = ssub.s32 128, 128
      %12 = vsyncadd [#allocation3], %s11
      %s14 = sshll.u32 [#allocation2], 4
      %s15 = int_to_ptr.vmem [resolvable:$true] %s14
      %17 = dma.hbm_to_vmem [thread:$0]  %s0, 128, %s15, [#allocation3]
    $region5: #{tpu_custom_call.1} parent=1 // pred_fallthru
      _
    // Predicated region
    $region6: #{tpu_custom_call.1} parent=1 // pred_check
      _
    $region7: #{tpu_custom_call.1} parent=1 // pred_check_branch
      %19 = sbr.rel (0) target = $region9
    $region8: #{tpu_custom_call.1} parent=1 // pred_region
      %20 = dma.done [#allocation3], 128
    $region9: #{tpu_custom_call.1} parent=1 // pred_fallthru
      _
    %v21 = vld [vmem:[#allocation2] sm:$0xff]
    %22 = vst [vmem:[#allocation5] sm:$0xff] %v21
    // Predicated region
    $region10: #{tpu_custom_call.1} parent=1 // pred_check
      _
    $region11: #{tpu_custom_call.1} parent=1 // pred_check_branch
      %24 = sbr.rel (0) target = $region13
    $region12: #{tpu_custom_call.1} parent=1 // pred_region
      %s26 = ssub.s32 128, 128
      %27 = vsyncadd [#allocation4], %s26
      %s29 = sshll.u32 [#allocation5], 4
      %s30 = int_to_ptr.vmem [resolvable:$true] %s29
      %32 = dma.vmem_to_hbm [thread:$0]  %s30, 128, %s1, [#allocation4]
    $region13: #{tpu_custom_call.1} parent=1 // pred_fallthru
      _
    // Predicated region
    $region14: #{tpu_custom_call.1} parent=1 // pred_check
      _
    $region15: #{tpu_custom_call.1} parent=1 // pred_check_branch
      %34 = sbr.rel (0) target = $region17
    $region16: #{tpu_custom_call.1} parent=1 // pred_region
      %35 = dma.done [#allocation4], 128
    $region17: #{tpu_custom_call.1} parent=1 // pred_fallthru
      _
    %36 = vsyncpa [#allocation3], 1
    %37 = vsyncpa [#allocation4], 1

</llo_original>
